<compile_context>
chip_gen: v7x
topology: tpu7x:2x2x1
jax: 0.10.0
libtpu: 0.0.40
codegen_flags: <defaults>
</compile_context>

<pallas_src>
import functools

import numpy as np
import jax
import jax.numpy as jnp
from jax.experimental import pallas as pl
from jax.experimental.pallas import tpu as pltpu


# ----------------------------------------------------------------------------
# Kernels
# ----------------------------------------------------------------------------
def _se_fused_kernel(x_ref, w1_ref, b1_ref, w2_ref, b2_ref, o_ref):
    # Squeeze: per-channel spatial mean = lane (last-axis) reduction.
    # Accumulate in f32 even if activations ever stream in bf16.
    avg = jnp.mean(x_ref[...].astype(jnp.float32), axis=-1)            # (Bt, C)

    # Excitation MLP, batched over Bt rows so the MXU sees a real matmul
    # ((Bt, C) @ (C, bneck)) instead of a single-lane matvec.
    h = jnp.dot(avg, w1_ref[...], preferred_element_type=jnp.float32) + b1_ref[...]
    h = jnp.maximum(h, 0.0)                                             # (Bt, bneck)
    att = jnp.dot(h, w2_ref[...], preferred_element_type=jnp.float32) + b2_ref[...]
    att = jax.nn.sigmoid(att)                                           # (Bt, C)

    # Re-read x_ref for the multiply (VMEM re-reads are ~free); keeping no
    # full-tile value live across the reduction avoids an extra VMEM temp.
    o_ref[...] = (x_ref[...] * att[:, :, None].astype(o_ref.dtype)).astype(o_ref.dtype)


def _se_att_kernel(x_ref, w1_ref, b1_ref, w2_ref, b2_ref, att_ref, sum_ref, *,
                   hw_total):
    # Phase A of the two-phase fallback: accumulate per-(batch, channel) sums
    # over spatial tiles, then run the tiny FCs once at the last spatial step.
    hw_i = pl.program_id(1)

    @pl.when(hw_i == 0)
    def _():
        sum_ref[...] = jnp.zeros_like(sum_ref)

    x = x_ref[...].astype(jnp.float32)                                  # (Bt, C, HWt)
    hwt = x.shape[-1]
    if hw_total % hwt != 0:
        # Final spatial block is padded: mask lanes past the end of the row.
        lane = jax.lax.broadcasted_iota(jnp.int32, x.shape, 2)
        x = jnp.where(hw_i * hwt + lane < hw_total, x, 0.0)
    sum_ref[...] += jnp.sum(x, axis=-1)                                 # (Bt, C)

    @pl.when(hw_i == pl.num_programs(1) - 1)
    def _():
        avg = sum_ref[...] * (1.0 / hw_total)
        h = jnp.dot(avg, w1_ref[...], preferred_element_type=jnp.float32) + b1_ref[...]
        h = jnp.maximum(h, 0.0)
        att = jnp.dot(h, w2_ref[...], preferred_element_type=jnp.float32) + b2_ref[...]
        att_ref[...] = jax.nn.sigmoid(att).astype(att_ref.dtype)


def _se_scale_kernel(att_ref, x_ref, o_ref):
    # Phase B of the two-phase fallback: stream x and apply the channel scale.
    att = att_ref[...].astype(o_ref.dtype)[:, :, None]                  # (Bt, C, 1)
    o_ref[...] = x_ref[...] * att


# ----------------------------------------------------------------------------
# Wrapper / planning helpers
# ----------------------------------------------------------------------------
def _vmem_capacity_bytes():
    """Per-TensorCore VMEM capacity, with a conservative (v7x) fallback."""
    try:
        info = pltpu.get_tpu_info()
        cap = getattr(info, "vmem_capacity_bytes", None)
        if cap:
            return int(cap)
    except Exception:
        pass
    return 64 << 20   # v7x per-TC VMEM; safe lower bound for v5e/v6e too.


def _choose_batch_tile(batch, per_batch_bytes, vmem_budget):
    """How many batch elements to pack into one grid step.

    Big steps amortize the ~0.35us/step fixed cost and fill sublanes; but when
    the batch is large enough we keep >= ~8 steps so both v7x TensorCores get
    a pipelined stream of work."""
    max_by_vmem = max(1, vmem_budget // max(1, 4 * per_batch_bytes))
    want = max(1, -(-(2 << 20) // max(1, per_batch_bytes)))   # ~2 MiB per step
    bt = max(1, min(batch, max_by_vmem, want))
    if batch // bt < 8:
        alt = max(1, batch // 8)
        if alt * per_batch_bytes >= (1 << 20):
            bt = min(bt, alt)
    return int(bt)


def se_attention(x_nchw, w1, b1, w2, b2, *,
                 donate_input=False, force_two_phase=False, hw_tile=None):
    """SEAttention forward (dims=(-1, -2)).

    x_nchw: (B, C, H, W); w1: (C, bneck); b1: (bneck,); w2: (bneck, C);
    b2: (C,).  Returns (B, C, H, W) matching the PyTorch module."""
    B, C, H, W = x_nchw.shape
    HW = H * W
    bneck = w1.shape[1]
    dtype = x_nchw.dtype
    itemsize = jnp.dtype(dtype).itemsize

    # Free, contiguous reshape (no transpose, no extra HBM pass).
    x_k = x_nchw.reshape(B, C, HW)
    b1r = b1.reshape(1, bneck)
    b2r = b2.reshape(1, C)

    # TODO(synk): for SE shapes where HW is small / not a multiple of 128
    # (e.g. 7x7, 14x14) and C >= 128, a channels-last (B, HW, C) presentation
    # would make stores fully lane-dense; it needs a real transpose (an extra
    # HBM pass), so it is not the default here.

    vmem_cap = _vmem_capacity_bytes()
    # Headroom for compiler-internal scratch + double buffers: ~110 MiB usable
    # on v5e/v6e (128 MiB physical), ~48 MiB on v7x (64 MiB physical).
    vmem_budget = int(min(max(vmem_cap - (16 << 20), 24 << 20), 110 << 20))

    weight_bytes = 2 * (C * bneck + bneck * C + bneck + C) * 4    # double-buffered f32
    per_batch_bytes = C * HW * itemsize
    fused_fits = (4 * per_batch_bytes + weight_bytes + (2 << 20)) <= vmem_budget

    if fused_fits and not force_two_phase:
        # ------------------------------------------------------------------
        # Fused VMEM-resident plan: 1 HBM read + 1 HBM write of x.
        # ------------------------------------------------------------------
        bt = _choose_batch_tile(B, per_batch_bytes,
                                vmem_budget - weight_bytes - (2 << 20))
        needed = 4 * bt * per_batch_bytes + weight_bytes + (2 << 20)
        vmem_limit = int(min(max(32 << 20, needed),
                             max(vmem_cap - (8 << 20), 32 << 20)))

        out = pl.pallas_call(
            _se_fused_kernel,
            out_shape=jax.ShapeDtypeStruct((B, C, HW), dtype),
            grid=(pl.cdiv(B, bt),),
            in_specs=[
                pl.BlockSpec((bt, C, HW), lambda b: (b, 0, 0)),   # x tile
                pl.BlockSpec((C, bneck), lambda b: (0, 0)),       # w1
                pl.BlockSpec((1, bneck), lambda b: (0, 0)),       # b1
                pl.BlockSpec((bneck, C), lambda b: (0, 0)),       # w2
                pl.BlockSpec((1, C), lambda b: (0, 0)),           # b2
            ],
            out_specs=pl.BlockSpec((bt, C, HW), lambda b: (b, 0, 0)),
            compiler_params=pltpu.CompilerParams(
                dimension_semantics=("parallel",),
                vmem_limit_bytes=vmem_limit,
            ),
            input_output_aliases={0: 0} if donate_input else {},
        )(x_k, w1, b1r, w2, b2r)
        return out.reshape(B, C, H, W)

    # ----------------------------------------------------------------------
    # Two-phase fallback (activation too big to stay VMEM-resident):
    #   A) spatially tiled mean accumulation + tiny FCs  -> att (B, C)
    #   B) tiled excitation multiply                     -> out (B, C, HW)
    # HBM traffic: 2 reads + 1 write of x (vs 1R+1W for the fused plan).
    # ----------------------------------------------------------------------
    bt = B if B <= 8 else 8            # 8-sublane-aligned (or full-B) att blocks
    if hw_tile is not None:
        hwt = int(hw_tile)
    else:
        budget_x = max(vmem_budget - weight_bytes - (2 << 20), 4 << 20)
        hwt = budget_x // (4 * bt * C * itemsize)
        hwt = max(128, (hwt // 128) * 128)
    hwt = min(hwt, HW)
    # TODO(synk): if even a (bt, C, 128) tile overflows VMEM (C in the millions),
    # add channel tiling as a second accumulation axis.

    needed = 4 * bt * C * hwt * itemsize + weight_bytes + (2 << 20)
    vmem_limit = int(min(max(32 << 20, needed),
                         max(vmem_cap - (8 << 20), 32 << 20)))
    grid = (pl.cdiv(B, bt), pl.cdiv(HW, hwt))

    att = pl.pallas_call(
        functools.partial(_se_att_kernel, hw_total=HW),
        out_shape=jax.ShapeDtypeStruct((B, C), jnp.float32),
        grid=grid,
        in_specs=[
            pl.BlockSpec((bt, C, hwt), lambda b, h: (b, 0, h)),   # x spatial tile
            pl.BlockSpec((C, bneck), lambda b, h: (0, 0)),        # w1
            pl.BlockSpec((1, bneck), lambda b, h: (0, 0)),        # b1
            pl.BlockSpec((bneck, C), lambda b, h: (0, 0)),        # w2
            pl.BlockSpec((1, C), lambda b, h: (0, 0)),            # b2
        ],
        out_specs=pl.BlockSpec((bt, C), lambda b, h: (b, 0)),
        scratch_shapes=[pltpu.VMEM((bt, C), jnp.float32)],
        compiler_params=pltpu.CompilerParams(
            dimension_semantics=("parallel", "arbitrary"),
            vmem_limit_bytes=vmem_limit,
        ),
    )(x_k, w1, b1r, w2, b2r)

    out = pl.pallas_call(
        _se_scale_kernel,
        out_shape=jax.ShapeDtypeStruct((B, C, HW), dtype),
        grid=grid,
        in_specs=[
            pl.BlockSpec((bt, C), lambda b, h: (b, 0)),           # att
            pl.BlockSpec((bt, C, hwt), lambda b, h: (b, 0, h)),   # x spatial tile
        ],
        out_specs=pl.BlockSpec((bt, C, hwt), lambda b, h: (b, 0, h)),
        compiler_params=pltpu.CompilerParams(
            dimension_semantics=("parallel", "parallel"),
            vmem_limit_bytes=vmem_limit,
        ),
        input_output_aliases={1: 0} if donate_input else {},
    )(att, x_k)
    return out.reshape(B, C, H, W)


def _reference(x_nchw, w1, b1, w2, b2):
    # Pure-JAX reference mirroring the PyTorch forward.
    avg = jnp.mean(x_nchw, axis=(-1, -2))                     # (B, C)
    h = jnp.maximum(avg @ w1 + b1, 0.0)                       # (B, bneck)
    att = jax.nn.sigmoid(h @ w2 + b2)                         # (B, C)
    return att[:, :, None, None] * x_nchw                     # (B, C, H, W)


if __name__ == "__main__":
    key = jax.random.PRNGKey(0)
    kx, k1, k2, k3, k4, kx2 = jax.random.split(key, 6)

    B, C, H, W = 2, 4, 16, 16
    ratio = 0.5
    bneck = int(np.round(C * ratio))                          # 2

    x = jax.random.normal(kx, (B, C, H, W), dtype=jnp.float32)
    # Synthetic parameters for Linear(C->bneck) and Linear(bneck->C).
    w1 = jax.random.normal(k1, (C, bneck), dtype=jnp.float32) * 0.1
    b1 = jax.random.normal(k2, (bneck,), dtype=jnp.float32) * 0.1
    w2 = jax.random.normal(k3, (bneck, C), dtype=jnp.float32) * 0.1
    b2 = jax.random.normal(k4, (C,), dtype=jnp.float32) * 0.1

    # --- Test 1: fused VMEM-resident plan (default at this size). ------------
    out = jax.block_until_ready(se_attention(x, w1, b1, w2, b2))
    ref = _reference(x, w1, b1, w2, b2)
    assert out.shape == (B, C, H, W)
    assert jnp.allclose(out, ref, atol=1e-5, rtol=1e-5)

    # --- Test 2: two-phase fallback, incl. a padded (masked) spatial tile. ---
    H2 = W2 = 12                                              # HW=144, not /128
    x2 = jax.random.normal(kx2, (B, C, H2, W2), dtype=jnp.float32)
    out2 = jax.block_until_ready(
        se_attention(x2, w1, b1, w2, b2, force_two_phase=True, hw_tile=128))
    ref2 = _reference(x2, w1, b1, w2, b2)
    assert out2.shape == (B, C, H2, W2)
    assert jnp.allclose(out2, ref2, atol=1e-5, rtol=1e-5)

    print("KERNEL_OK")
</pallas_src>

<mosaic_0001>
module attributes {stable_mosaic.version = 11 : i64} {
  func.func @_se_fused_kernel(%arg0: i32, %arg1: memref<2x4x256xf32, #tpu.memory_space<vmem>>, %arg2: memref<4x2xf32, #tpu.memory_space<vmem>>, %arg3: memref<1x2xf32, #tpu.memory_space<vmem>>, %arg4: memref<2x4xf32, #tpu.memory_space<vmem>>, %arg5: memref<1x4xf32, #tpu.memory_space<vmem>>, %arg6: memref<2x4x256xf32, #tpu.memory_space<vmem>>) attributes {dimension_semantics = [#tpu.dimension_semantics<parallel>], iteration_bounds = array<i64: 1>, scalar_prefetch = 0 : i64, scratch_operands = 0 : i64, tpu.core_type = #tpu.core_type<tc>, window_params = [{transform_indices = @transform_0, window_bounds = array<i64: 2, 4, 256>}, {pipeline_mode = #tpu.pipeline_mode<synchronous>, transform_indices = @transform_1, window_bounds = array<i64: 4, 2>}, {pipeline_mode = #tpu.pipeline_mode<synchronous>, transform_indices = @transform_2, window_bounds = array<i64: 1, 2>}, {pipeline_mode = #tpu.pipeline_mode<synchronous>, transform_indices = @transform_3, window_bounds = array<i64: 2, 4>}, {pipeline_mode = #tpu.pipeline_mode<synchronous>, transform_indices = @transform_4, window_bounds = array<i64: 1, 4>}, {transform_indices = @transform_5, window_bounds = array<i64: 2, 4, 256>}]} {
    %c0 = arith.constant 0 : index
    %c0_0 = arith.constant 0 : index
    %c0_1 = arith.constant 0 : index
    %0 = vector.load %arg1[%c0, %c0_0, %c0_1] : memref<2x4x256xf32, #tpu.memory_space<vmem>>, vector<2x4x256xf32>
    %cst = arith.constant dense<0.000000e+00> : vector<2x4xf32>
    %1 = vector.multi_reduction <add>, %0, %cst [2] : vector<2x4x256xf32> to vector<2x4xf32>
    %cst_2 = arith.constant 2.560000e+02 : f32
    %2 = vector.broadcast %cst_2 : f32 to vector<2x4xf32>
    %3 = arith.divf %1, %2 : vector<2x4xf32>
    %c0_3 = arith.constant 0 : index
    %c0_4 = arith.constant 0 : index
    %4 = vector.load %arg2[%c0_3, %c0_4] : memref<4x2xf32, #tpu.memory_space<vmem>>, vector<4x2xf32>
    %cst_5 = arith.constant dense<0.000000e+00> : vector<2x2xf32>
    %5 = tpu.matmul %3, %4, %cst_5 {dimension_numbers = #tpu.dot_dimension_numbers<[1], [0], [0], [1], [0, 0, 1, 1], [], []>} : vector<2x4xf32>, vector<4x2xf32>, vector<2x2xf32> -> vector<2x2xf32>
    %c0_6 = arith.constant 0 : index
    %c0_7 = arith.constant 0 : index
    %6 = vector.load %arg3[%c0_6, %c0_7] : memref<1x2xf32, #tpu.memory_space<vmem>>, vector<1x2xf32>
    %7 = vector.broadcast %6 : vector<1x2xf32> to vector<2x2xf32>
    %8 = arith.addf %5, %7 : vector<2x2xf32>
    %cst_8 = arith.constant 0.000000e+00 : f32
    %9 = vector.broadcast %cst_8 : f32 to vector<2x2xf32>
    %10 = arith.maximumf %8, %9 : vector<2x2xf32>
    %c0_9 = arith.constant 0 : index
    %c0_10 = arith.constant 0 : index
    %11 = vector.load %arg4[%c0_9, %c0_10] : memref<2x4xf32, #tpu.memory_space<vmem>>, vector<2x4xf32>
    %cst_11 = arith.constant dense<0.000000e+00> : vector<2x4xf32>
    %12 = tpu.matmul %10, %11, %cst_11 {dimension_numbers = #tpu.dot_dimension_numbers<[1], [0], [0], [1], [0, 0, 1, 1], [], []>} : vector<2x2xf32>, vector<2x4xf32>, vector<2x4xf32> -> vector<2x4xf32>
    %c0_12 = arith.constant 0 : index
    %c0_13 = arith.constant 0 : index
    %13 = vector.load %arg5[%c0_12, %c0_13] : memref<1x4xf32, #tpu.memory_space<vmem>>, vector<1x4xf32>
    %14 = vector.broadcast %13 : vector<1x4xf32> to vector<2x4xf32>
    %15 = arith.addf %12, %14 : vector<2x4xf32>
    %16 = arith.negf %15 : vector<2x4xf32>
    %17 = math.exp %16 : vector<2x4xf32>
    %cst_14 = arith.constant 1.000000e+00 : f32
    %18 = vector.broadcast %cst_14 : f32 to vector<2x4xf32>
    %19 = arith.addf %18, %17 : vector<2x4xf32>
    %20 = arith.divf %18, %19 : vector<2x4xf32>
    %c0_15 = arith.constant 0 : index
    %c0_16 = arith.constant 0 : index
    %c0_17 = arith.constant 0 : index
    %21 = vector.load %arg1[%c0_15, %c0_16, %c0_17] : memref<2x4x256xf32, #tpu.memory_space<vmem>>, vector<2x4x256xf32>
    %22 = vector.shape_cast %20 : vector<2x4xf32> to vector<2x4x1xf32>
    %23 = vector.broadcast %22 : vector<2x4x1xf32> to vector<2x4x256xf32>
    %24 = arith.mulf %21, %23 : vector<2x4x256xf32>
    %c0_18 = arith.constant 0 : index
    %c0_19 = arith.constant 0 : index
    %c0_20 = arith.constant 0 : index
    %25 = vector.load %arg6[%c0_18, %c0_19, %c0_20] : memref<2x4x256xf32, #tpu.memory_space<vmem>>, vector<2x4x256xf32>
    tpu.vector_store %arg6[%c0_18, %c0_19, %c0_20], %24 {strides = array<i32>} : memref<2x4x256xf32, #tpu.memory_space<vmem>>, vector<2x4x256xf32>,
    return
  }
  func.func @transform_0(%arg0: i32) -> (i32, i32, i32) {
    %c0_i32 = arith.constant 0 : i32
    %c0_i32_0 = arith.constant 0 : i32
    %c0_i32_1 = arith.constant 0 : i32
    return %arg0, %c0_i32, %c0_i32_0 : i32, i32, i32
  }
  func.func @transform_1(%arg0: i32) -> (i32, i32) {
    %c0_i32 = arith.constant 0 : i32
    %c0_i32_0 = arith.constant 0 : i32
    %c0_i32_1 = arith.constant 0 : i32
    return %c0_i32, %c0_i32_0 : i32, i32
  }
  func.func @transform_2(%arg0: i32) -> (i32, i32) {
    %c0_i32 = arith.constant 0 : i32
    %c0_i32_0 = arith.constant 0 : i32
    %c0_i32_1 = arith.constant 0 : i32
    return %c0_i32, %c0_i32_0 : i32, i32
  }
  func.func @transform_3(%arg0: i32) -> (i32, i32) {
    %c0_i32 = arith.constant 0 : i32
    %c0_i32_0 = arith.constant 0 : i32
    %c0_i32_1 = arith.constant 0 : i32
    return %c0_i32, %c0_i32_0 : i32, i32
  }
  func.func @transform_4(%arg0: i32) -> (i32, i32) {
    %c0_i32 = arith.constant 0 : i32
    %c0_i32_0 = arith.constant 0 : i32
    %c0_i32_1 = arith.constant 0 : i32
    return %c0_i32, %c0_i32_0 : i32, i32
  }
  func.func @transform_5(%arg0: i32) -> (i32, i32, i32) {
    %c0_i32 = arith.constant 0 : i32
    %c0_i32_0 = arith.constant 0 : i32
    %c0_i32_1 = arith.constant 0 : i32
    return %arg0, %c0_i32, %c0_i32_0 : i32, i32, i32
  }
}

</mosaic_0001>

<llo_original>
// kernel: tpu_custom_call.1
$region0: #{tpu_custom_call.1}
  #allocation0 [shape = 'u32[]', space=smem, size = 0x4, offset = 0x4, fixed_abs, tag = 'smem constant byte address 0x4 - core index']
  #allocation1 [shape = 'u32[144,128]{1,0:T(1,128)}', space=vmem, size = 0x12000, scoped, tag = 'internal scratch']
  %s0 = inlined_call_operand.hbm [shape: f32[2,4,256], index: 0, kind: input, shape index: {}]
  %s1 = inlined_call_operand.vmem [shape: f32[4,2], index: 1, kind: input, shape index: {}]
  %s2 = inlined_call_operand.vmem [shape: f32[1,2], index: 2, kind: input, shape index: {}]
  %s3 = inlined_call_operand.vmem [shape: f32[2,4], index: 3, kind: input, shape index: {}]
  %s4 = inlined_call_operand.vmem [shape: f32[1,4], index: 4, kind: input, shape index: {}]
  %s5 = inlined_call_operand.hbm [shape: f32[2,4,256], index: 5, kind: output, shape index: {}]
  %s6 = sld [smem:[#allocation0]]
  $region34: #{tpu_custom_call.1} parent=0
    _
  %s8 = ssub.s32 1, %s6
  %s9 = scalar_select 0, %s8, %s6
  $region1: #{tpu_custom_call.1} parent=0
    #allocation2 [shape = 'u8[8192]{0}', space=vmem, size = 0x2000, scoped, tag = 'input window, operand 0, single buffered']
    #allocation3 [shape = 's32[1]{0}', space=sflag, size = 0x4, scoped, tag = 'scoped memory for tpu_custom_call.1']
    #allocation4 [shape = 's32[1]{0}', space=sflag, size = 0x4, scoped, tag = 'scoped memory for tpu_custom_call.1']
    #allocation5 [shape = 'u8[8192]{0}', space=vmem, size = 0x2000, scoped, tag = 'output window, operand 0, single buffered']
    %10 = vsyncpa [#allocation3], 0
    %11 = vsyncpa [#allocation4], 0
    // Predicated region
    $region2: #{tpu_custom_call.1} parent=1 // pred_check
      _
    $region3: #{tpu_custom_call.1} parent=1 // pred_check_branch
      %13 = sbr.rel (0) target = $region5
    $region4: #{tpu_custom_call.1} parent=1 // pred_region
      %s15 = ssub.s32 256, 256
      %16 = vsyncadd [#allocation3], %s15
      %s17 = sshll.u32 [#allocation2], 4
      %s18 = int_to_ptr.vmem [resolvable:$true] %s17
      %23 = dma.hbm_to_vmem [thread:$0]  %s0, 256, %s18, [#allocation3], 128, 128, 8
    $region5: #{tpu_custom_call.1} parent=1 // pred_fallthru
      _
    // Predicated region
    $region6: #{tpu_custom_call.1} parent=1 // pred_check
      _
    $region7: #{tpu_custom_call.1} parent=1 // pred_check_branch
      %25 = sbr.rel (0) target = $region9
    $region8: #{tpu_custom_call.1} parent=1 // pred_region
      _
    $region9: #{tpu_custom_call.1} parent=1 // pred_fallthru
      _
    // Predicated region
    $region10: #{tpu_custom_call.1} parent=1 // pred_check
      _
    $region11: #{tpu_custom_call.1} parent=1 // pred_check_branch
      %27 = sbr.rel (0) target = $region13
    $region12: #{tpu_custom_call.1} parent=1 // pred_region
      _
    $region13: #{tpu_custom_call.1} parent=1 // pred_fallthru
      _
    // Predicated region
    $region14: #{tpu_custom_call.1} parent=1 // pred_check
      _
    $region15: #{tpu_custom_call.1} parent=1 // pred_check_branch
      %29 = sbr.rel (0) target = $region17
    $region16: #{tpu_custom_call.1} parent=1 // pred_region
      _
    $region17: #{tpu_custom_call.1} parent=1 // pred_fallthru
      _
    // Predicated region
    $region18: #{tpu_custom_call.1} parent=1 // pred_check
      _
    $region19: #{tpu_custom_call.1} parent=1 // pred_check_branch
      %31 = sbr.rel (0) target = $region21
    $region20: #{tpu_custom_call.1} parent=1 // pred_region
      _
    $region21: #{tpu_custom_call.1} parent=1 // pred_fallthru
      _
    // Predicated region
    $region22: #{tpu_custom_call.1} parent=1 // pred_check
      _
    $region23: #{tpu_custom_call.1} parent=1 // pred_check_branch
      %33 = sbr.rel (0) target = $region25
    $region24: #{tpu_custom_call.1} parent=1 // pred_region
      %34 = dma.done [#allocation3], 256
    $region25: #{tpu_custom_call.1} parent=1 // pred_fallthru
      _
    %v35 = vld [vmem:[#allocation2] sm:$0xff]
    %v36 = vld [vmem:[#allocation2 + $0x8] sm:$0xff]
    %v39 = vcombine.high %v35, %v35
    %v40 = vcombine.high %v36, %v36
    %vm43 = vcmask 1043456
    %v44 = vsel %vm43, %v35, 0.0
    %v45 = vsel %vm43, %v39, 0.0
    %v46 = vadd.f32 %v44, %v45
    %47 = vadd.xlane.f32.xlu0 %v46
    %v48 = vpop.xlane.xlu0 %47
    %v49 = vsel %vm43, %v36, 0.0
    %v50 = vsel %vm43, %v40, 0.0
    %v51 = vadd.f32 %v49, %v50
    %52 = vadd.xlane.f32.xlu0 %v51
    %v53 = vpop.xlane.xlu0 %52
    %v54 = vrcp.pop 256.0
    %v55 = vmul.f32 %v48, %v54
    %v56 = vmul.f32 %v53, %v54
    %v57 = vld [vmem:[%s1] sm:$0xf]
    %v58 = vld [vmem:[%s2] sm:$0x1]
    %v60 = vlaneseq
    %v61 = vshrl.u32 %v60, 7
    %v62 = vsub.s32 0, %v61
    %v63 = vrot.slane %v58, %v62
    %v67 = vlaneseq
    %v68 = vand.u32 %v67, 127
    %v69 = vlaneseq
    %v70 = vshrl.u32 %v69, 7
    %v71 = vsub.s32 %v68, %v70
    %v72 = vrot.slane %v55, %v71
    %v73 = vlaneseq
    %v74 = vshrl.u32 %v73, 7
    %v75 = vsub.s32 %v68, %v74
    %v76 = vrot.slane %v56, %v75
    %vm77 = vcmask 1041409
    %v78 = vsel %vm77, %v76, %v72
    %vm79 = vcmask 31744
    %v80 = vsel %vm79, %v78, 0
    %v83 = vsel %vm43, %v57, 0
    %85 = vmatprep.subr.mxu0 0.0
    %86 = vmatpush1.msra.mxu0 %v83
    %87 = vmatprep.subr.mxu0 0.0
    %88 = vmatpush1.msra.mxu0 0.0
    %89 = vmatprep.subr.mxu0 0.0
    %90 = vmatpush1.msra.mxu0 0.0
    %91 = vmatprep.subr.mxu0 0.0
    %92 = vmatpush1.msra.mxu0 0.0
    %93 = vmatprep.subr.mxu0 0.0
    %94 = vmatpush1.msra.mxu0 0.0
    %95 = vmatprep.subr.mxu0 0.0
    %96 = vmatpush1.msra.mxu0 0.0
    %97 = vmatprep.subr.mxu0 0.0
    %98 = vmatpush1.msra.mxu0 0.0
    %99 = vmatprep.subr.mxu0 0.0
    %100 = vmatpush1.msra.mxu0 0.0
    %101 = vmatprep.subr.mxu0 0.0
    %102 = vmatpush1.msra.mxu0 0.0
    %103 = vmatprep.subr.mxu0 0.0
    %104 = vmatpush1.msra.mxu0 0.0
    %105 = vmatprep.subr.mxu0 0.0
    %106 = vmatpush1.msra.mxu0 0.0
    %107 = vmatprep.subr.mxu0 0.0
    %108 = vmatpush1.msra.mxu0 0.0
    %109 = vmatprep.subr.mxu0 0.0
    %110 = vmatpush1.msra.mxu0 0.0
    %111 = vmatprep.subr.mxu0 0.0
    %112 = vmatpush1.msra.mxu0 0.0
    %113 = vmatprep.subr.mxu0 0.0
    %114 = vmatpush1.msra.mxu0 0.0
    %115 = vmatprep.subr.mxu0 0.0
    %116 = vmatpush1.msra.mxu0 0.0
    %117 = vmatprep.subr.mxu0 0.0
    %118 = vmatpush1.msra.mxu0 0.0
    %119 = vmatprep.subr.mxu0 0.0
    %120 = vmatpush1.msra.mxu0 0.0
    %121 = vmatprep.subr.mxu0 0.0
    %122 = vmatpush1.msra.mxu0 0.0
    %123 = vmatprep.subr.mxu0 0.0
    %124 = vmatpush1.msra.mxu0 0.0
    %125 = vmatprep.subr.mxu0 0.0
    %126 = vmatpush1.msra.mxu0 0.0
    %127 = vmatprep.subr.mxu0 0.0
    %128 = vmatpush1.msra.mxu0 0.0
    %129 = vmatprep.subr.mxu0 0.0
    %130 = vmatpush1.msra.mxu0 0.0
    %131 = vmatprep.subr.mxu0 0.0
    %132 = vmatpush1.msra.mxu0 0.0
    %133 = vmatprep.subr.mxu0 0.0
    %134 = vmatpush1.msra.mxu0 0.0
    %135 = vmatprep.subr.mxu0 0.0
    %136 = vmatpush1.msra.mxu0 0.0
    %137 = vmatprep.subr.mxu0 0.0
    %138 = vmatpush1.msra.mxu0 0.0
    %139 = vmatprep.subr.mxu0 0.0
    %140 = vmatpush1.msra.mxu0 0.0
    %141 = vmatprep.subr.mxu0 0.0
    %142 = vmatpush1.msra.mxu0 0.0
    %143 = vmatprep.subr.mxu0 0.0
    %144 = vmatpush1.msra.mxu0 0.0
    %145 = vmatprep.subr.mxu0 0.0
    %146 = vmatpush1.msra.mxu0 0.0
    %147 = vmatprep.subr.mxu0 0.0
    %148 = vmatpush1.msra.mxu0 0.0
    %149 = vmatprep.mubr.f32.mxu0 0.0
    %150 = vmatmul.mubr.f32.gmra.mrb[0].mxu0 %v80
    %v151 = vpop.f32.mrb[0].mxu0
    %v152 = vadd.f32 %v63, %v151
    %v153 = vpop.f32.mrb[0].mxu0
    %154 = vdwg.mxu0
    %v155 = vmax.f32 %v152, 0.0
    %v156 = vld [vmem:[%s3] sm:$0x3]
    %v157 = vld [vmem:[%s4] sm:$0x1]
    %v159 = vlaneseq
    %v160 = vshrl.u32 %v159, 7
    %v161 = vsub.s32 0, %v160
    %v162 = vrot.slane %v157, %v161
    %vm164 = vcmask 15360
    %v166 = vsel %vm164, %v155, 0
    %vm168 = vcmask 1041408
    %v170 = vsel %vm168, %v156, 0
    %172 = vmatprep.subr.mxu0 0.0
    %173 = vmatpush1.msra.mxu0 %v170
    %174 = vmatprep.subr.mxu0 0.0
    %175 = vmatpush1.msra.mxu0 0.0
    %176 = vmatprep.subr.mxu0 0.0
    %177 = vmatpush1.msra.mxu0 0.0
    %178 = vmatprep.subr.mxu0 0.0
    %179 = vmatpush1.msra.mxu0 0.0
    %180 = vmatprep.subr.mxu0 0.0
    %181 = vmatpush1.msra.mxu0 0.0
    %182 = vmatprep.subr.mxu0 0.0
    %183 = vmatpush1.msra.mxu0 0.0
    %184 = vmatprep.subr.mxu0 0.0
    %185 = vmatpush1.msra.mxu0 0.0
    %186 = vmatprep.subr.mxu0 0.0
    %187 = vmatpush1.msra.mxu0 0.0
    %188 = vmatprep.subr.mxu0 0.0
    %189 = vmatpush1.msra.mxu0 0.0
    %190 = vmatprep.subr.mxu0 0.0
    %191 = vmatpush1.msra.mxu0 0.0
    %192 = vmatprep.subr.mxu0 0.0
    %193 = vmatpush1.msra.mxu0 0.0
    %194 = vmatprep.subr.mxu0 0.0
    %195 = vmatpush1.msra.mxu0 0.0
    %196 = vmatprep.subr.mxu0 0.0
    %197 = vmatpush1.msra.mxu0 0.0
    %198 = vmatprep.subr.mxu0 0.0
    %199 = vmatpush1.msra.mxu0 0.0
    %200 = vmatprep.subr.mxu0 0.0
    %201 = vmatpush1.msra.mxu0 0.0
    %202 = vmatprep.subr.mxu0 0.0
    %203 = vmatpush1.msra.mxu0 0.0
    %204 = vmatprep.subr.mxu0 0.0
    %205 = vmatpush1.msra.mxu0 0.0
    %206 = vmatprep.subr.mxu0 0.0
    %207 = vmatpush1.msra.mxu0 0.0
    %208 = vmatprep.subr.mxu0 0.0
    %209 = vmatpush1.msra.mxu0 0.0
    %210 = vmatprep.subr.mxu0 0.0
    %211 = vmatpush1.msra.mxu0 0.0
    %212 = vmatprep.subr.mxu0 0.0
    %213 = vmatpush1.msra.mxu0 0.0
    %214 = vmatprep.subr.mxu0 0.0
    %215 = vmatpush1.msra.mxu0 0.0
    %216 = vmatprep.subr.mxu0 0.0
    %217 = vmatpush1.msra.mxu0 0.0
    %218 = vmatprep.subr.mxu0 0.0
    %219 = vmatpush1.msra.mxu0 0.0
    %220 = vmatprep.subr.mxu0 0.0
    %221 = vmatpush1.msra.mxu0 0.0
    %222 = vmatprep.subr.mxu0 0.0
    %223 = vmatpush1.msra.mxu0 0.0
    %224 = vmatprep.subr.mxu0 0.0
    %225 = vmatpush1.msra.mxu0 0.0
    %226 = vmatprep.subr.mxu0 0.0
    %227 = vmatpush1.msra.mxu0 0.0
    %228 = vmatprep.subr.mxu0 0.0
    %229 = vmatpush1.msra.mxu0 0.0
    %230 = vmatprep.subr.mxu0 0.0
    %231 = vmatpush1.msra.mxu0 0.0
    %232 = vmatprep.subr.mxu0 0.0
    %233 = vmatpush1.msra.mxu0 0.0
    %234 = vmatprep.subr.mxu0 0.0
    %235 = vmatpush1.msra.mxu0 0.0
    %236 = vmatprep.mubr.f32.mxu0 0.0
    %237 = vmatmul.mubr.f32.gmra.mrb[0].mxu0 %v166
    %v238 = vpop.f32.mrb[0].mxu0
    %v239 = vadd.f32 %v162, %v238
    %v240 = vpop.f32.mrb[0].mxu0
    %241 = vdwg.mxu0
    %v242 = vxor.u32 %v239, 2147483648
    %v243 = vmul.f32 %v242, 1.442695
    %v244 = vpow.pop %v243
    %v245 = vadd.f32 %v244, 1.0
    %v246 = vrcp.pop %v245
    %v247 = vmul.f32 1.0, %v246
    %v248 = vlaneseq
    %v249 = vshrl.u32 %v248, 7
    %v250 = vsub.s32 0, %v249
    %v251 = vrot.slane %v247, %v250
    %253 = vbcast.lane.b32.xlu0 %v251, 256
    %v254 = vpop.permute.xlu0 %253
    %v255 = vlaneseq
    %v256 = vshrl.u32 %v255, 7
    %v257 = vsub.s32 1, %v256
    %v258 = vrot.slane %v247, %v257
    %260 = vbcast.lane.b32.xlu0 %v258, 256
    %v261 = vpop.permute.xlu0 %260
    %v265 = vunpack.c.l.s4 839922192
    %v266 = vunpack.c.0.s8 %v265
    %v267 = vlaneseq
    %v268 = vshrl.u32 %v267, 7
    %v269 = vsub.s32 %v266, %v268
    %v270 = vrot.slane %v254, %v269
    %v272 = vunpack.c.l.s4 839922192
    %v273 = vunpack.c.0.s8 %v272
    %v274 = vlaneseq
    %v275 = vshrl.u32 %v274, 7
    %v276 = vsub.s32 %v273, %v275
    %v277 = vrot.slane %v261, %v276
    %v280 = vmul.f32 %v35, %v270
    %v281 = vmul.f32 %v36, %v277
    %282 = vst [vmem:[#allocation5] sm:$0xff] %v280
    %283 = vst [vmem:[#allocation5 + $0x8] sm:$0xff] %v281
    // Predicated region
    $region26: #{tpu_custom_call.1} parent=1 // pred_check
      _
    $region27: #{tpu_custom_call.1} parent=1 // pred_check_branch
      %285 = sbr.rel (0) target = $region29
    $region28: #{tpu_custom_call.1} parent=1 // pred_region
      %s287 = ssub.s32 256, 256
      %288 = vsyncadd [#allocation4], %s287
      %s289 = sshll.u32 [#allocation5], 4
      %s290 = int_to_ptr.vmem [resolvable:$true] %s289
      %295 = dma.vmem_to_hbm [thread:$0]  %s290, 256, %s5, [#allocation4], 128, 128, 8
    $region29: #{tpu_custom_call.1} parent=1 // pred_fallthru
      _
    // Predicated region
    $region30: #{tpu_custom_call.1} parent=1 // pred_check
      _
    $region31: #{tpu_custom_call.1} parent=1 // pred_check_branch
      %297 = sbr.rel (0) target = $region33
    $region32: #{tpu_custom_call.1} parent=1 // pred_region
      %298 = dma.done [#allocation4], 256
    $region33: #{tpu_custom_call.1} parent=1 // pred_fallthru
      _
    %299 = vsyncpa [#allocation3], 1
    %300 = vsyncpa [#allocation4], 1

</llo_original>
